<compile_context>
chip_gen: v7x
topology: tpu7x:2x2x1
jax: 0.10.0
libtpu: 0.0.40
codegen_flags: <defaults>
</compile_context>

<pallas_src>
import jax
import jax.numpy as jnp
from jax.experimental import pallas as pl
from jax.experimental.pallas import tpu as pltpu

IN_FEATURES = 60
HIDDEN = 40
OUT_FEATURES = 4
DEFAULT_TB = 4096  # rows per grid step; ~1-2 MiB of x per step amortizes step overhead


def _round_up(n, m):
    return ((n + m - 1) // m) * m


def mlp_kernel(x_ref, w1_ref, b1_ref, w2_ref, b2_ref, o_ref):
    # MXU operands in bf16 (halves vmatmul count), accumulation in f32.
    x = x_ref[...].astype(jnp.bfloat16)                                   # (TB, 60)
    w1 = w1_ref[...].astype(jnp.bfloat16)                                 # (60, 40)
    h = jnp.dot(x, w1, preferred_element_type=jnp.float32) + b1_ref[...]  # (TB, 40) f32
    # Sigmoid via a single EUP transcendental: sigmoid(h) = 0.5 * tanh(h/2) + 0.5
    h = 0.5 * jnp.tanh(0.5 * h) + 0.5
    # Layer 2: Linear(40, 4)
    w2 = w2_ref[...].astype(jnp.bfloat16)                                 # (40, 4)
    logits = (
        jnp.dot(h.astype(jnp.bfloat16), w2, preferred_element_type=jnp.float32)
        + b2_ref[...]
    )                                                                     # (TB, 4) f32
    # Numerically stable softmax over dim=1; exact divide (tiny tensors) so rows
    # sum to 1 to f32 precision.
    m = jnp.max(logits, axis=1, keepdims=True)
    e = jnp.exp(logits - m)
    o_ref[...] = (e / jnp.sum(e, axis=1, keepdims=True)).astype(o_ref.dtype)


def _pick_tile(batch, align, tb_max):
    """Tile big enough to amortize per-step overhead, aligned to the input dtype's
    sublane packing, and (for medium/large batches) giving >=2 grid steps so v7x's
    two TensorCores both get work on the 'parallel' batch axis."""
    if batch <= 2 * align:
        return _round_up(max(batch, 1), align)
    return min(tb_max, _round_up(-(-batch // 2), align))


def mlp_forward(x, w1, b1, w2, b2, *, tb=DEFAULT_TB, out_dtype=jnp.float32):
    """x: (B, 60) f32 or bf16 (bf16 transport halves x HBM traffic; supply it from
    upstream — do not cast here). Weights f32, W stored as (in, out).
    Returns (B, 4) in out_dtype (default f32, matching the PyTorch module)."""
    B = x.shape[0]
    align = 16 if x.dtype == jnp.bfloat16 else 8  # bf16 packs 16 sublanes per vreg
    tb_sel = _pick_tile(B, align, tb)
    grid = (pl.cdiv(B, tb_sel),)  # partial last block: OOB writes masked; rows independent

    weight_bytes = (w1.size + b1.size + w2.size + b2.size) * 4
    cost = pl.CostEstimate(
        flops=B * (2 * IN_FEATURES * HIDDEN + 2 * HIDDEN * OUT_FEATURES),
        transcendentals=B * (HIDDEN + OUT_FEATURES),
        bytes_accessed=B
        * (IN_FEATURES * x.dtype.itemsize + OUT_FEATURES * jnp.dtype(out_dtype).itemsize)
        + weight_bytes,
    )

    return pl.pallas_call(
        mlp_kernel,
        out_shape=jax.ShapeDtypeStruct((B, OUT_FEATURES), out_dtype),
        grid=grid,
        in_specs=[
            pl.BlockSpec((tb_sel, IN_FEATURES), lambda i: (i, 0)),     # x: tiled, pipelined
            pl.BlockSpec((IN_FEATURES, HIDDEN), lambda i: (0, 0)),     # w1: resident
            pl.BlockSpec((1, HIDDEN), lambda i: (0, 0)),               # b1: resident
            pl.BlockSpec((HIDDEN, OUT_FEATURES), lambda i: (0, 0)),    # w2: resident
            pl.BlockSpec((1, OUT_FEATURES), lambda i: (0, 0)),         # b2: resident
        ],
        out_specs=pl.BlockSpec((tb_sel, OUT_FEATURES), lambda i: (i, 0)),
        compiler_params=pltpu.CompilerParams(
            dimension_semantics=("parallel",),
            vmem_limit_bytes=32 * 1024 * 1024,  # v5e default is 16 MiB; larger tiles need headroom
        ),
        cost_estimate=cost,
    )(x, w1, b1, w2, b2)


def init_params(key):
    """Deterministic init mirroring torch.nn.Linear default U(-1/sqrt(fan_in), +1/sqrt(fan_in))."""
    k1, k2, k3, k4 = jax.random.split(key, 4)
    bound1 = 1.0 / jnp.sqrt(60.0)
    bound2 = 1.0 / jnp.sqrt(40.0)
    w1 = jax.random.uniform(k1, (60, 40), jnp.float32, -bound1, bound1)
    b1 = jax.random.uniform(k2, (1, 40), jnp.float32, -bound1, bound1)
    w2 = jax.random.uniform(k3, (40, 4), jnp.float32, -bound2, bound2)
    b2 = jax.random.uniform(k4, (1, 4), jnp.float32, -bound2, bound2)
    return w1, b1, w2, b2


def mlp_reference(x, w1, b1, w2, b2):
    h = jax.nn.sigmoid(x.astype(jnp.float32) @ w1 + b1)
    return jax.nn.softmax(h @ w2 + b2, axis=1)


if __name__ == "__main__":
    key = jax.random.PRNGKey(0)
    kx, kp = jax.random.split(key)
    w1, b1, w2, b2 = init_params(kp)

    # --- Small f32 batch (matches the PyTorch module's default precision) ---
    B = 8
    x = jax.random.normal(kx, (B, 60), jnp.float32)
    out = jax.block_until_ready(mlp_forward(x, w1, b1, w2, b2))
    ref = mlp_reference(x, w1, b1, w2, b2)
    assert out.shape == (B, 4)
    # bf16 MXU operands introduce a small (~1e-3) error vs. the f32 reference
    assert jnp.allclose(out, ref, atol=2e-2, rtol=2e-2)
    # exact softmax normalization -> rows sum to 1 to f32 precision
    assert jnp.allclose(jnp.sum(out, axis=1), 1.0, atol=1e-4)

    # --- Larger batch, bf16 transport, not a multiple of the tile (exercises the
    #     cdiv grid with a masked partial last block + multi-step pipeline) ---
    B2 = 600
    x2 = jax.random.normal(jax.random.PRNGKey(1), (B2, 60), jnp.float32)
    x2_bf16 = x2.astype(jnp.bfloat16)
    out2 = jax.block_until_ready(mlp_forward(x2_bf16, w1, b1, w2, b2))
    ref2 = mlp_reference(x2_bf16, w1, b1, w2, b2)  # same bf16-rounded input, f32 math
    assert out2.shape == (B2, 4)
    assert jnp.allclose(out2, ref2, atol=2e-2, rtol=2e-2)
    assert jnp.allclose(jnp.sum(out2, axis=1), 1.0, atol=1e-4)

    print("KERNEL_OK")
</pallas_src>

<mosaic_0001>
module attributes {stable_mosaic.version = 11 : i64} {
  func.func @mlp_kernel(%arg0: i32, %arg1: memref<8x60xf32, #tpu.memory_space<vmem>>, %arg2: memref<60x40xf32, #tpu.memory_space<vmem>>, %arg3: memref<1x40xf32, #tpu.memory_space<vmem>>, %arg4: memref<40x4xf32, #tpu.memory_space<vmem>>, %arg5: memref<1x4xf32, #tpu.memory_space<vmem>>, %arg6: memref<8x4xf32, #tpu.memory_space<vmem>>) attributes {dimension_semantics = [#tpu.dimension_semantics<parallel>], iteration_bounds = array<i64: 1>, scalar_prefetch = 0 : i64, scratch_operands = 0 : i64, tpu.core_type = #tpu.core_type<tc>, window_params = [{transform_indices = @transform_0, window_bounds = array<i64: 8, 60>}, {pipeline_mode = #tpu.pipeline_mode<synchronous>, transform_indices = @transform_1, window_bounds = array<i64: 60, 40>}, {pipeline_mode = #tpu.pipeline_mode<synchronous>, transform_indices = @transform_2, window_bounds = array<i64: 1, 40>}, {pipeline_mode = #tpu.pipeline_mode<synchronous>, transform_indices = @transform_3, window_bounds = array<i64: 40, 4>}, {pipeline_mode = #tpu.pipeline_mode<synchronous>, transform_indices = @transform_4, window_bounds = array<i64: 1, 4>}, {transform_indices = @transform_5, window_bounds = array<i64: 8, 4>}]} {
    %c0 = arith.constant 0 : index
    %c0_0 = arith.constant 0 : index
    %0 = vector.load %arg1[%c0, %c0_0] : memref<8x60xf32, #tpu.memory_space<vmem>>, vector<8x60xf32>
    %1 = arith.truncf %0 : vector<8x60xf32> to vector<8x60xbf16>
    %c0_1 = arith.constant 0 : index
    %c0_2 = arith.constant 0 : index
    %2 = vector.load %arg2[%c0_1, %c0_2] : memref<60x40xf32, #tpu.memory_space<vmem>>, vector<60x40xf32>
    %3 = arith.truncf %2 : vector<60x40xf32> to vector<60x40xbf16>
    %cst = arith.constant dense<0.000000e+00> : vector<8x40xf32>
    %4 = tpu.matmul %1, %3, %cst {dimension_numbers = #tpu.dot_dimension_numbers<[1], [0], [0], [1], [0, 0, 1, 1], [], []>} : vector<8x60xbf16>, vector<60x40xbf16>, vector<8x40xf32> -> vector<8x40xf32>
    %c0_3 = arith.constant 0 : index
    %c0_4 = arith.constant 0 : index
    %5 = vector.load %arg3[%c0_3, %c0_4] : memref<1x40xf32, #tpu.memory_space<vmem>>, vector<1x40xf32>
    %6 = vector.broadcast %5 : vector<1x40xf32> to vector<8x40xf32>
    %7 = arith.addf %4, %6 : vector<8x40xf32>
    %cst_5 = arith.constant 5.000000e-01 : f32
    %8 = vector.broadcast %cst_5 : f32 to vector<8x40xf32>
    %9 = arith.mulf %8, %7 : vector<8x40xf32>
    %10 = math.tanh %9 : vector<8x40xf32>
    %cst_6 = arith.constant 5.000000e-01 : f32
    %11 = vector.broadcast %cst_6 : f32 to vector<8x40xf32>
    %12 = arith.mulf %11, %10 : vector<8x40xf32>
    %cst_7 = arith.constant 5.000000e-01 : f32
    %13 = vector.broadcast %cst_7 : f32 to vector<8x40xf32>
    %14 = arith.addf %12, %13 : vector<8x40xf32>
    %c0_8 = arith.constant 0 : index
    %c0_9 = arith.constant 0 : index
    %15 = vector.load %arg4[%c0_8, %c0_9] : memref<40x4xf32, #tpu.memory_space<vmem>>, vector<40x4xf32>
    %16 = arith.truncf %15 : vector<40x4xf32> to vector<40x4xbf16>
    %17 = arith.truncf %14 : vector<8x40xf32> to vector<8x40xbf16>
    %cst_10 = arith.constant dense<0.000000e+00> : vector<8x4xf32>
    %18 = tpu.matmul %17, %16, %cst_10 {dimension_numbers = #tpu.dot_dimension_numbers<[1], [0], [0], [1], [0, 0, 1, 1], [], []>} : vector<8x40xbf16>, vector<40x4xbf16>, vector<8x4xf32> -> vector<8x4xf32>
    %c0_11 = arith.constant 0 : index
    %c0_12 = arith.constant 0 : index
    %19 = vector.load %arg5[%c0_11, %c0_12] : memref<1x4xf32, #tpu.memory_space<vmem>>, vector<1x4xf32>
    %20 = vector.broadcast %19 : vector<1x4xf32> to vector<8x4xf32>
    %21 = arith.addf %18, %20 : vector<8x4xf32>
    %cst_13 = arith.constant dense<0xFF800000> : vector<8xf32>
    %22 = vector.multi_reduction <maximumf>, %21, %cst_13 [1] : vector<8x4xf32> to vector<8xf32>
    %23 = vector.shape_cast %22 : vector<8xf32> to vector<8x1xf32>
    %24 = vector.broadcast %23 : vector<8x1xf32> to vector<8x4xf32>
    %25 = arith.subf %21, %24 : vector<8x4xf32>
    %26 = math.exp %25 : vector<8x4xf32>
    %cst_14 = arith.constant dense<0.000000e+00> : vector<8xf32>
    %27 = vector.multi_reduction <add>, %26, %cst_14 [1] : vector<8x4xf32> to vector<8xf32>
    %28 = vector.shape_cast %27 : vector<8xf32> to vector<8x1xf32>
    %29 = vector.broadcast %28 : vector<8x1xf32> to vector<8x4xf32>
    %30 = arith.divf %26, %29 : vector<8x4xf32>
    %c0_15 = arith.constant 0 : index
    %c0_16 = arith.constant 0 : index
    %31 = vector.load %arg6[%c0_15, %c0_16] : memref<8x4xf32, #tpu.memory_space<vmem>>, vector<8x4xf32>
    tpu.vector_store %arg6[%c0_15, %c0_16], %30 {strides = array<i32>} : memref<8x4xf32, #tpu.memory_space<vmem>>, vector<8x4xf32>,
    return
  }
  func.func @transform_0(%arg0: i32) -> (i32, i32) {
    %c0_i32 = arith.constant 0 : i32
    %c0_i32_0 = arith.constant 0 : i32
    return %arg0, %c0_i32 : i32, i32
  }
  func.func @transform_1(%arg0: i32) -> (i32, i32) {
    %c0_i32 = arith.constant 0 : i32
    %c0_i32_0 = arith.constant 0 : i32
    %c0_i32_1 = arith.constant 0 : i32
    return %c0_i32, %c0_i32_0 : i32, i32
  }
  func.func @transform_2(%arg0: i32) -> (i32, i32) {
    %c0_i32 = arith.constant 0 : i32
    %c0_i32_0 = arith.constant 0 : i32
    %c0_i32_1 = arith.constant 0 : i32
    return %c0_i32, %c0_i32_0 : i32, i32
  }
  func.func @transform_3(%arg0: i32) -> (i32, i32) {
    %c0_i32 = arith.constant 0 : i32
    %c0_i32_0 = arith.constant 0 : i32
    %c0_i32_1 = arith.constant 0 : i32
    return %c0_i32, %c0_i32_0 : i32, i32
  }
  func.func @transform_4(%arg0: i32) -> (i32, i32) {
    %c0_i32 = arith.constant 0 : i32
    %c0_i32_0 = arith.constant 0 : i32
    %c0_i32_1 = arith.constant 0 : i32
    return %c0_i32, %c0_i32_0 : i32, i32
  }
  func.func @transform_5(%arg0: i32) -> (i32, i32) {
    %c0_i32 = arith.constant 0 : i32
    %c0_i32_0 = arith.constant 0 : i32
    return %arg0, %c0_i32 : i32, i32
  }
}

</mosaic_0001>

<llo_original>
// kernel: tpu_custom_call.1
$region0: #{tpu_custom_call.1}
  #allocation0 [shape = 'u32[]', space=smem, size = 0x4, offset = 0x4, fixed_abs, tag = 'smem constant byte address 0x4 - core index']
  #allocation1 [shape = 'u32[144,128]{1,0:T(1,128)}', space=vmem, size = 0x12000, scoped, tag = 'internal scratch']
  %s0 = inlined_call_operand.vmem [shape: f32[8,60], index: 0, kind: input, shape index: {}]
  %s1 = inlined_call_operand.vmem [shape: f32[60,40], index: 1, kind: input, shape index: {}]
  %s2 = inlined_call_operand.vmem [shape: f32[1,40], index: 2, kind: input, shape index: {}]
  %s3 = inlined_call_operand.vmem [shape: f32[40,4], index: 3, kind: input, shape index: {}]
  %s4 = inlined_call_operand.vmem [shape: f32[1,4], index: 4, kind: input, shape index: {}]
  %s5 = inlined_call_operand.vmem [shape: f32[8,4], index: 5, kind: output, shape index: {}]
  %s6 = sld [smem:[#allocation0]]
  $region30: #{tpu_custom_call.1} parent=0
    _
  %s8 = ssub.s32 1, %s6
  %s9 = scalar_select 0, %s8, %s6
  // Predicated region
  $region2: #{tpu_custom_call.1} parent=0 // pred_check
    _
  $region3: #{tpu_custom_call.1} parent=0 // pred_check_branch
    %11 = sbr.rel (0) target = $region5
  $region4: #{tpu_custom_call.1} parent=0 // pred_region
    _
  $region5: #{tpu_custom_call.1} parent=0 // pred_fallthru
    _
  // Predicated region
  $region6: #{tpu_custom_call.1} parent=0 // pred_check
    _
  $region7: #{tpu_custom_call.1} parent=0 // pred_check_branch
    %13 = sbr.rel (0) target = $region9
  $region8: #{tpu_custom_call.1} parent=0 // pred_region
    _
  $region9: #{tpu_custom_call.1} parent=0 // pred_fallthru
    _
  // Predicated region
  $region10: #{tpu_custom_call.1} parent=0 // pred_check
    _
  $region11: #{tpu_custom_call.1} parent=0 // pred_check_branch
    %15 = sbr.rel (0) target = $region13
  $region12: #{tpu_custom_call.1} parent=0 // pred_region
    _
  $region13: #{tpu_custom_call.1} parent=0 // pred_fallthru
    _
  // Predicated region
  $region14: #{tpu_custom_call.1} parent=0 // pred_check
    _
  $region15: #{tpu_custom_call.1} parent=0 // pred_check_branch
    %17 = sbr.rel (0) target = $region17
  $region16: #{tpu_custom_call.1} parent=0 // pred_region
    _
  $region17: #{tpu_custom_call.1} parent=0 // pred_fallthru
    _
  // Predicated region
  $region18: #{tpu_custom_call.1} parent=0 // pred_check
    _
  $region19: #{tpu_custom_call.1} parent=0 // pred_check_branch
    %19 = sbr.rel (0) target = $region21
  $region20: #{tpu_custom_call.1} parent=0 // pred_region
    _
  $region21: #{tpu_custom_call.1} parent=0 // pred_fallthru
    _
  %v21 = vld [vmem:[%s0] sm:$0xff]
  %v22 = vpack.c.bf16 %v21, %v21
  %v23 = vld [vmem:[%s1] sm:$0xff]
  %v24 = vld [vmem:[%s1 + $0x8] sm:$0xff]
  %v25 = vld [vmem:[%s1 + $0x10] sm:$0xff]
  %v26 = vld [vmem:[%s1 + $0x18] sm:$0xff]
  %v27 = vld [vmem:[%s1 + $0x20] sm:$0xff]
  %v28 = vld [vmem:[%s1 + $0x28] sm:$0xff]
  %v29 = vld [vmem:[%s1 + $0x30] sm:$0xff]
  %v30 = vld [vmem:[%s1 + $0x38] sm:$0xf]
  %v31 = vpack.c.bf16 %v24, %v23
  %v32 = vpack.c.bf16 %v26, %v25
  %v33 = vpack.c.bf16 %v28, %v27
  %v34 = vpack.c.bf16 %v30, %v29
  %v35 = vld [vmem:[%s2] sm:$0x1]
  %v37 = vlaneseq
  %v38 = vshrl.u32 %v37, 7
  %v39 = vsub.s32 0, %v38
  %v40 = vrot.slane %v35, %v39
  %vm42 = vcmask 490496
  %v44 = vsel %vm42, %v22, 0
  %vm46 = vcmask 1045504
  %v48 = vsel %vm46, %v34, 0
  %50 = vmatprep.subr.bf16.mxu0 0
  %51 = vmatpush1.bf16.msra.mxu0 %v31
  %52 = vmatprep.subr.bf16.mxu0 0
  %53 = vmatpush1.bf16.msra.mxu0 %v32
  %54 = vmatprep.subr.bf16.mxu0 0
  %55 = vmatpush1.bf16.msra.mxu0 %v33
  %56 = vmatprep.subr.bf16.mxu0 0
  %57 = vmatpush1.bf16.msra.mxu0 %v48
  %58 = vmatprep.subr.bf16.mxu0 0
  %59 = vmatpush1.bf16.msra.mxu0 0
  %60 = vmatprep.subr.bf16.mxu0 0
  %61 = vmatpush1.bf16.msra.mxu0 0
  %62 = vmatprep.subr.bf16.mxu0 0
  %63 = vmatpush1.bf16.msra.mxu0 0
  %64 = vmatprep.subr.bf16.mxu0 0
  %65 = vmatpush1.bf16.msra.mxu0 0
  %66 = vmatprep.subr.bf16.mxu0 0
  %67 = vmatpush1.bf16.msra.mxu0 0
  %68 = vmatprep.subr.bf16.mxu0 0
  %69 = vmatpush1.bf16.msra.mxu0 0
  %70 = vmatprep.subr.bf16.mxu0 0
  %71 = vmatpush1.bf16.msra.mxu0 0
  %72 = vmatprep.subr.bf16.mxu0 0
  %73 = vmatpush1.bf16.msra.mxu0 0
  %74 = vmatprep.subr.bf16.mxu0 0
  %75 = vmatpush1.bf16.msra.mxu0 0
  %76 = vmatprep.subr.bf16.mxu0 0
  %77 = vmatpush1.bf16.msra.mxu0 0
  %78 = vmatprep.subr.bf16.mxu0 0
  %79 = vmatpush1.bf16.msra.mxu0 0
  %80 = vmatprep.subr.bf16.mxu0 0
  %81 = vmatpush1.bf16.msra.mxu0 0
  %82 = vmatprep.mubr.bf16.mxu0 0
  %83 = vmatmul.mubr.bf16.gmra.mrb[0].mxu0 %v44
  %v84 = vpop.f32.mrb[0].mxu0
  %v85 = vadd.f32 %v40, %v84
  %v86 = vpop.f32.mrb[0].mxu0
  %v87 = vpop.f32.mrb[0].mxu0
  %v88 = vpop.f32.mrb[0].mxu0
  %89 = vdwg.mxu0
  %v90 = vmul.f32 %v85, 0.5
  %v91 = vtanh.pop %v90
  %v92 = vmul.f32 %v91, 0.5
  %v93 = vadd.f32 %v92, 0.5
  %v94 = vld [vmem:[%s3] sm:$0xff]
  %v95 = vld [vmem:[%s3 + $0x8] sm:$0xff]
  %v96 = vld [vmem:[%s3 + $0x10] sm:$0xff]
  %v97 = vld [vmem:[%s3 + $0x18] sm:$0xff]
  %v98 = vld [vmem:[%s3 + $0x20] sm:$0xff]
  %v99 = vpack.c.bf16 %v95, %v94
  %v100 = vpack.c.bf16 %v97, %v96
  %v101 = vpack.c.bf16 %v98, %v98
  %v102 = vpack.c.bf16 %v93, %v93
  %v103 = vld [vmem:[%s4] sm:$0x1]
  %v105 = vlaneseq
  %v106 = vshrl.u32 %v105, 7
  %v107 = vsub.s32 0, %v106
  %v108 = vrot.slane %v103, %v107
  %vm110 = vcmask 326656
  %v112 = vsel %vm110, %v102, 0
  %vm114 = vcmask 1043456
  %v116 = vsel %vm114, %v101, 0
  %118 = vmatprep.subr.bf16.mxu0 0
  %119 = vmatpush1.bf16.msra.mxu0 %v99
  %120 = vmatprep.subr.bf16.mxu0 0
  %121 = vmatpush1.bf16.msra.mxu0 %v100
  %122 = vmatprep.subr.bf16.mxu0 0
  %123 = vmatpush1.bf16.msra.mxu0 %v116
  %124 = vmatprep.subr.bf16.mxu0 0
  %125 = vmatpush1.bf16.msra.mxu0 0
  %126 = vmatprep.subr.bf16.mxu0 0
  %127 = vmatpush1.bf16.msra.mxu0 0
  %128 = vmatprep.subr.bf16.mxu0 0
  %129 = vmatpush1.bf16.msra.mxu0 0
  %130 = vmatprep.subr.bf16.mxu0 0
  %131 = vmatpush1.bf16.msra.mxu0 0
  %132 = vmatprep.subr.bf16.mxu0 0
  %133 = vmatpush1.bf16.msra.mxu0 0
  %134 = vmatprep.subr.bf16.mxu0 0
  %135 = vmatpush1.bf16.msra.mxu0 0
  %136 = vmatprep.subr.bf16.mxu0 0
  %137 = vmatpush1.bf16.msra.mxu0 0
  %138 = vmatprep.subr.bf16.mxu0 0
  %139 = vmatpush1.bf16.msra.mxu0 0
  %140 = vmatprep.subr.bf16.mxu0 0
  %141 = vmatpush1.bf16.msra.mxu0 0
  %142 = vmatprep.subr.bf16.mxu0 0
  %143 = vmatpush1.bf16.msra.mxu0 0
  %144 = vmatprep.subr.bf16.mxu0 0
  %145 = vmatpush1.bf16.msra.mxu0 0
  %146 = vmatprep.subr.bf16.mxu0 0
  %147 = vmatpush1.bf16.msra.mxu0 0
  %148 = vmatprep.subr.bf16.mxu0 0
  %149 = vmatpush1.bf16.msra.mxu0 0
  %150 = vmatprep.mubr.bf16.mxu0 0
  %151 = vmatmul.mubr.bf16.gmra.mrb[0].mxu0 %v112
  %v152 = vpop.f32.mrb[0].mxu0
  %v153 = vadd.f32 %v108, %v152
  %v154 = vpop.f32.mrb[0].mxu0
  %v155 = vpop.f32.mrb[0].mxu0
  %v156 = vpop.f32.mrb[0].mxu0
  %157 = vdwg.mxu0
  %vm158 = vcmask 31744
  %v159 = vsel %vm158, %v153, -inf
  %160 = vmax.xlane.f32.xlu0 %v159
  %v161 = vpop.xlane.xlu0 %160
  %v162 = vsub.f32 %v153, %v161
  %v163 = vmul.f32 %v162, 1.442695
  %v164 = vpow.pop %v163
  %v165 = vsel %vm158, %v164, 0.0
  %166 = vadd.xlane.f32.xlu0 %v165
  %v167 = vpop.xlane.xlu0 %166
  %v168 = vrcp.pop %v167
  %v169 = vmul.f32 %v164, %v168
  %170 = vst.msk [vmem:[%s5] sm:$0xff] %vm158, %v169
  // Predicated region
  $region22: #{tpu_custom_call.1} parent=0 // pred_check
    _
  $region23: #{tpu_custom_call.1} parent=0 // pred_check_branch
    %172 = sbr.rel (0) target = $region25
  $region24: #{tpu_custom_call.1} parent=0 // pred_region
    _
  $region25: #{tpu_custom_call.1} parent=0 // pred_fallthru
    _
  // Predicated region
  $region26: #{tpu_custom_call.1} parent=0 // pred_check
    _
  $region27: #{tpu_custom_call.1} parent=0 // pred_check_branch
    %174 = sbr.rel (0) target = $region29
  $region28: #{tpu_custom_call.1} parent=0 // pred_region
    _
  $region29: #{tpu_custom_call.1} parent=0 // pred_fallthru
    _

</llo_original>
